<compile_context>
chip_gen: v6e
topology: v6e:2x2x1
jax: 0.10.0
libtpu: 0.0.40
codegen_flags: <defaults>
</compile_context>

<pallas_src>
import functools
import math

import jax
import jax.numpy as jnp
from jax.experimental import pallas as pl
from jax.experimental.pallas import tpu as pltpu

TOP_N = 3
_LANES = 128
_SUBLANES = 8
_SENTINEL = 1 << 30          # > any valid flattened index (int32 flat index)
_NUM_VREG_TEMPS = 7          # f32/int32 tile-sized temporaries in the kernel


def _top3_kernel(diff_ref, idx_ref, val_c_ref, idx_c_ref, *,
                 n_valid, chunk_n, multi_chunk, needs_mask):
    """diff_ref: (bt, 1, chunk_n) tile of difference; idx_ref: (bt, 8, 128) i32.

    Winner k of batch row b ends up in idx_ref[b, k, :] (replicated across
    lanes); the wrapper reads lane 0.  val_c_ref / idx_c_ref hold the running
    top-3 (value, index) carry across chunks of the flattened axis.
    """
    ci = pl.program_id(1)

    x = diff_ref[...]                                   # (bt, 1, chunk_n)
    # TODO(synk): keep bf16 values on v6e/v7x (native bf16 VPU path) and only
    # run the int32 tie-break at 32-bit; v5e needs this f32 upcast.
    absv = jnp.abs(x).astype(jnp.float32)

    pos = jax.lax.broadcasted_iota(jnp.int32, absv.shape, 2)   # single iota
    f_idx = ci * chunk_n + pos if multi_chunk else pos          # global flat idx

    neg_inf = jnp.float32(-jnp.inf)
    if needs_mask:   # ragged tail of the last (partial) chunk block
        masked = jnp.where(f_idx < n_valid, absv, neg_inf)
    else:
        masked = absv

    if multi_chunk:
        @pl.when(ci == 0)
        def _():
            val_c_ref[...] = jnp.full(val_c_ref.shape, -jnp.inf, jnp.float32)
            idx_c_ref[...] = jnp.full(idx_c_ref.shape, _SENTINEL, jnp.int32)
        c_val = val_c_ref[...]
        c_idx = idx_c_ref[...]

    win_vals, win_idxs = [], []
    for _ in range(TOP_N):
        mx = jnp.max(masked, axis=(1, 2), keepdims=True)            # (bt,1,1)
        if multi_chunk:
            mx = jnp.maximum(mx, jnp.max(c_val, axis=(1, 2), keepdims=True))
        cand = jnp.where(masked == mx, f_idx, _SENTINEL)
        win = jnp.min(cand, axis=(1, 2), keepdims=True)              # (bt,1,1)
        if multi_chunk:
            cand_c = jnp.where(c_val == mx, c_idx, _SENTINEL)
            win = jnp.minimum(win, jnp.min(cand_c, axis=(1, 2), keepdims=True))
        win_vals.append(mx)
        win_idxs.append(win)
        # Mask only the winner position (indices are globally unique across
        # chunk and carry, so masking both by index equality is safe).
        # TODO(synk): fold this winner-mask into the next round's compare to
        # shave ~2 full-tile passes/round in the VALU-bound regime (v6e/v7x).
        masked = jnp.where(f_idx == win, neg_inf, masked)
        if multi_chunk:
            c_val = jnp.where(c_idx == win, neg_inf, c_val)

    # Pack winner k into sublane k of the aligned (bt, 8, 128) block.
    sub = jax.lax.broadcasted_iota(jnp.int32, idx_ref.shape, 1)
    out_idx = jnp.full(idx_ref.shape, _SENTINEL, jnp.int32)
    for k in range(TOP_N):
        out_idx = jnp.where(sub == k, win_idxs[k], out_idx)

    if multi_chunk:
        out_val = jnp.full(val_c_ref.shape, -jnp.inf, jnp.float32)
        for k in range(TOP_N):
            out_val = jnp.where(sub == k, win_vals[k], out_val)
        val_c_ref[...] = out_val
        idx_c_ref[...] = out_idx

        @pl.when(ci == pl.num_programs(1) - 1)
        def _():
            idx_ref[...] = out_idx
    else:
        idx_ref[...] = out_idx


def _budgets():
    """(working-set budget for chunk sizing, scoped vmem limit) per generation."""
    try:
        info = pltpu.get_tpu_info()
        vmem_cap = int(getattr(info, "vmem_capacity_bytes", 64 * 1024 * 1024))
    except Exception:
        vmem_cap = 64 * 1024 * 1024                      # assume v7x-sized VMEM
    if vmem_cap >= 128 * 1024 * 1024:                    # v5e / v6e
        return 40 * 1024 * 1024, 64 * 1024 * 1024
    return 24 * 1024 * 1024, 48 * 1024 * 1024            # v7x (64 MiB / TC)


def _pick_batch_tile(batch):
    """Batch rows per grid step; keep >=2 steps on the parallel batch axis
    whenever possible so v7x's two TensorCores both get work."""
    for cand in (8, 4, 2):
        if batch % cand == 0 and batch // cand >= 2:
            return cand
    return 1


def _top3_indices(diff3, *, chunk_elems_override=None):
    """diff3: (B, 1, n) difference view. Returns (B, TOP_N) int32 flat indices."""
    batch, _, n = diff3.shape
    itemsize = jnp.dtype(diff3.dtype).itemsize

    bt = _pick_batch_tile(batch)
    ws_budget, vmem_limit = _budgets()
    # Budget: 2x double-buffered input block + ~7 f32/int32 tile temporaries.
    per_elem = 2 * itemsize + 4 * _NUM_VREG_TEMPS
    per_row_cap = max(_LANES, (ws_budget // per_elem) // bt)
    if chunk_elems_override is not None:
        per_row_cap = max(_LANES, int(chunk_elems_override))

    if n <= per_row_cap:
        chunk_n, nc = n, 1           # full last dim: legal even if n % 128 != 0
    else:
        chunk_n = (per_row_cap // _LANES) * _LANES       # multiple of 128
        nc = pl.cdiv(n, chunk_n)

    multi_chunk = nc > 1
    needs_mask = (nc * chunk_n) != n                     # ragged tail block

    kernel = functools.partial(
        _top3_kernel, n_valid=n, chunk_n=chunk_n,
        multi_chunk=multi_chunk, needs_mask=needs_mask)

    cost = pl.CostEstimate(
        flops=int(20 * batch * n),
        transcendentals=0,
        bytes_accessed=int(batch * n * itemsize + batch * _SUBLANES * _LANES * 4),
    )

    idx_block = pl.pallas_call(
        kernel,
        out_shape=jax.ShapeDtypeStruct((batch, _SUBLANES, _LANES), jnp.int32),
        grid_spec=pltpu.PrefetchScalarGridSpec(
            num_scalar_prefetch=0,
            grid=(batch // bt, nc),
            in_specs=[pl.BlockSpec((bt, 1, chunk_n), lambda b, c: (b, 0, c))],
            out_specs=pl.BlockSpec((bt, _SUBLANES, _LANES),
                                   lambda b, c: (b, 0, 0)),
            scratch_shapes=[
                pltpu.VMEM((bt, _SUBLANES, _LANES), jnp.float32),
                pltpu.VMEM((bt, _SUBLANES, _LANES), jnp.int32),
            ],
        ),
        compiler_params=pltpu.CompilerParams(
            dimension_semantics=("parallel", "arbitrary"),
            vmem_limit_bytes=vmem_limit,
        ),
        cost_estimate=cost,
    )(diff3)
    return idx_block[:, :TOP_N, 0]


@functools.partial(jax.jit, donate_argnums=(1,))
def _max1_update(difference, weight):
    batch = difference.shape[0]
    n = math.prod(difference.shape[1:])
    # Free reshape (merges contiguous trailing dims); no pad, no extra HBM pass.
    diff3 = difference.reshape(batch, 1, n)
    top_idx = _top3_indices(diff3)                       # (B, TOP_N) int32

    # +1 at the winning positions; weight is donated -> sparse in-place update.
    # mode="drop": sentinel / OOB indices (NaN rows, <3 valid elems) are no-ops.
    # TODO(synk): if the HLO shows this scatter defusing into a full copy of the
    # donated buffer, move the +1 into a tiny pallas_call with
    # input_output_aliases on `weight` and the indices scalar-prefetched.
    w_flat = weight.reshape(batch, n)
    rows = jnp.arange(batch, dtype=jnp.int32)[:, None]
    one = jnp.asarray(1.0, dtype=w_flat.dtype)
    w_flat = w_flat.at[rows, top_idx].add(one, mode="drop")
    return w_flat.reshape(weight.shape)


class Max1:
    """JAX/Pallas port of the PyTorch Max1 module."""

    def __init__(self, weight):
        self.weight = weight  # (B, C, H, W), same shape as `difference`

    def forward(self, difference, epoch=None):
        # The original computes torch.allclose(weight, zeros) into an unused
        # local, so it is skipped here. As in the original, epoch=None raises.
        if 1000 < epoch < 18000 and epoch % 200 == 0:
            self.weight = _max1_update(difference, self.weight)
            return self.weight
        else:
            return self.weight


def _reference_update(difference, weight):
    batch = difference.shape[0]
    flat = jnp.abs(difference.reshape(batch, -1).astype(jnp.float32))
    _, idxs = jax.lax.top_k(flat, TOP_N)
    add = jnp.zeros_like(weight.reshape(batch, -1))
    add = jax.vmap(lambda a, i: a.at[i].set(1.0))(add, idxs)
    return add.reshape(weight.shape) + weight


if __name__ == "__main__":
    key = jax.random.PRNGKey(0)
    k1, k2, k3 = jax.random.split(key, 3)

    # --- Index-kernel checks vs lax.top_k (single-chunk, chunked, ragged) ---
    def check_indices(shape, *, chunk_override=None, key=None):
        diff = jax.random.normal(key, shape, dtype=jnp.float32)
        b = shape[0]
        n = math.prod(shape[1:])
        got = _top3_indices(diff.reshape(b, 1, n),
                            chunk_elems_override=chunk_override)
        got = jax.block_until_ready(got)
        ref = jax.lax.top_k(jnp.abs(diff).reshape(b, -1), TOP_N)[1]
        assert jnp.array_equal(jnp.sort(got, axis=-1),
                               jnp.sort(ref.astype(jnp.int32), axis=-1)), \
            (shape, chunk_override)

    keys = jax.random.split(k3, 4)
    check_indices((2, 4, 16, 16), key=keys[0])                      # 1 chunk
    check_indices((2, 4, 16, 16), chunk_override=384, key=keys[1])  # 3 chunks, ragged tail block
    check_indices((2, 3, 5, 7), key=keys[2])                        # n=105, not /128
    check_indices((4, 3, 11, 13), chunk_override=128, key=keys[3])  # n=429, carry + tail mask

    # --- Full module test ---
    B, C, H, W = 2, 4, 16, 16
    difference = jax.random.normal(k1, (B, C, H, W), dtype=jnp.float32)
    init_weight = 0.25 * jax.random.normal(k2, (B, C, H, W), dtype=jnp.float32)

    # Reference computed BEFORE forward() because the weight buffer is donated.
    ref = jax.block_until_ready(_reference_update(difference, init_weight))

    mod = Max1(init_weight)

    # epoch that triggers the top-k update path (kernel call).
    out = jax.block_until_ready(mod.forward(difference, epoch=1200))
    assert out.shape == (B, C, H, W)
    assert jnp.allclose(out, ref, atol=1e-6), "mismatch vs reference"

    # epoch that takes the passthrough branch.
    out2 = jax.block_until_ready(mod.forward(difference, epoch=7))
    assert jnp.allclose(out2, out)

    print("KERNEL_OK")
</pallas_src>

<mosaic_0001>
module attributes {stable_mosaic.version = 11 : i64} {
  func.func @_top3_kernel(%arg0: i32, %arg1: i32, %arg2: memref<1x1x1024xf32, #tpu.memory_space<vmem>>, %arg3: memref<1x8x128xi32, #tpu.memory_space<vmem>>, %arg4: memref<1x8x128xf32, #tpu.memory_space<vmem>>, %arg5: memref<1x8x128xi32, #tpu.memory_space<vmem>>) attributes {dimension_semantics = [#tpu.dimension_semantics<parallel>, #tpu.dimension_semantics<arbitrary>], iteration_bounds = array<i64: 2, 1>, scalar_prefetch = 0 : i64, scratch_operands = 2 : i64, tpu.core_type = #tpu.core_type<tc>, window_params = [{transform_indices = @transform_0, window_bounds = array<i64: 1, 1, 1024>}, {transform_indices = @transform_1, window_bounds = array<i64: 1, 8, 128>}]} {
    %c0 = arith.constant 0 : index
    %c0_0 = arith.constant 0 : index
    %c0_1 = arith.constant 0 : index
    %0 = vector.load %arg2[%c0, %c0_0, %c0_1] : memref<1x1x1024xf32, #tpu.memory_space<vmem>>, vector<1x1x1024xf32>
    %1 = math.absf %0 : vector<1x1x1024xf32>
    %2 = tpu.iota {dimensions = array<i32: 2>} : vector<1x1x1024xi32>
    %cst = arith.constant dense<0xFF800000> : vector<1xf32>
    %3 = vector.multi_reduction <maximumf>, %1, %cst [1, 2] : vector<1x1x1024xf32> to vector<1xf32>
    %4 = vector.shape_cast %3 : vector<1xf32> to vector<1x1x1xf32>
    %5 = vector.broadcast %4 : vector<1x1x1xf32> to vector<1x1x1024xf32>
    %6 = arith.cmpf oeq, %1, %5 : vector<1x1x1024xf32>
    %c1073741824_i32 = arith.constant 1073741824 : i32
    %7 = vector.broadcast %c1073741824_i32 : i32 to vector<1x1x1024xi32>
    %8 = arith.select %6, %2, %7 : vector<1x1x1024xi1>, vector<1x1x1024xi32>
    %cst_2 = arith.constant dense<2147483647> : vector<1xi32>
    %9 = vector.multi_reduction <minsi>, %8, %cst_2 [1, 2] : vector<1x1x1024xi32> to vector<1xi32>
    %10 = vector.shape_cast %9 : vector<1xi32> to vector<1x1x1xi32>
    %11 = vector.broadcast %10 : vector<1x1x1xi32> to vector<1x1x1024xi32>
    %12 = arith.cmpi eq, %2, %11 : vector<1x1x1024xi32>
    %cst_3 = arith.constant 0xFF800000 : f32
    %13 = vector.broadcast %cst_3 : f32 to vector<1x1x1024xf32>
    %14 = arith.select %12, %13, %1 : vector<1x1x1024xi1>, vector<1x1x1024xf32>
    %cst_4 = arith.constant dense<0xFF800000> : vector<1xf32>
    %15 = vector.multi_reduction <maximumf>, %14, %cst_4 [1, 2] : vector<1x1x1024xf32> to vector<1xf32>
    %16 = vector.shape_cast %15 : vector<1xf32> to vector<1x1x1xf32>
    %17 = vector.broadcast %16 : vector<1x1x1xf32> to vector<1x1x1024xf32>
    %18 = arith.cmpf oeq, %14, %17 : vector<1x1x1024xf32>
    %c1073741824_i32_5 = arith.constant 1073741824 : i32
    %19 = vector.broadcast %c1073741824_i32_5 : i32 to vector<1x1x1024xi32>
    %20 = arith.select %18, %2, %19 : vector<1x1x1024xi1>, vector<1x1x1024xi32>
    %cst_6 = arith.constant dense<2147483647> : vector<1xi32>
    %21 = vector.multi_reduction <minsi>, %20, %cst_6 [1, 2] : vector<1x1x1024xi32> to vector<1xi32>
    %22 = vector.shape_cast %21 : vector<1xi32> to vector<1x1x1xi32>
    %23 = vector.broadcast %22 : vector<1x1x1xi32> to vector<1x1x1024xi32>
    %24 = arith.cmpi eq, %2, %23 : vector<1x1x1024xi32>
    %cst_7 = arith.constant 0xFF800000 : f32
    %25 = vector.broadcast %cst_7 : f32 to vector<1x1x1024xf32>
    %26 = arith.select %24, %25, %14 : vector<1x1x1024xi1>, vector<1x1x1024xf32>
    %cst_8 = arith.constant dense<0xFF800000> : vector<1xf32>
    %27 = vector.multi_reduction <maximumf>, %26, %cst_8 [1, 2] : vector<1x1x1024xf32> to vector<1xf32>
    %28 = vector.shape_cast %27 : vector<1xf32> to vector<1x1x1xf32>
    %29 = vector.broadcast %28 : vector<1x1x1xf32> to vector<1x1x1024xf32>
    %30 = arith.cmpf oeq, %26, %29 : vector<1x1x1024xf32>
    %c1073741824_i32_9 = arith.constant 1073741824 : i32
    %31 = vector.broadcast %c1073741824_i32_9 : i32 to vector<1x1x1024xi32>
    %32 = arith.select %30, %2, %31 : vector<1x1x1024xi1>, vector<1x1x1024xi32>
    %cst_10 = arith.constant dense<2147483647> : vector<1xi32>
    %33 = vector.multi_reduction <minsi>, %32, %cst_10 [1, 2] : vector<1x1x1024xi32> to vector<1xi32>
    %34 = vector.shape_cast %33 : vector<1xi32> to vector<1x1x1xi32>
    %35 = tpu.iota {dimensions = array<i32: 1>} : vector<1x8x128xi32>
    %c1073741824_i32_11 = arith.constant 1073741824 : i32
    %36 = vector.broadcast %c1073741824_i32_11 : i32 to vector<1x8x128xi32>
    %c0_i32 = arith.constant 0 : i32
    %37 = vector.broadcast %c0_i32 : i32 to vector<1x8x128xi32>
    %38 = arith.cmpi eq, %35, %37 : vector<1x8x128xi32>
    %39 = vector.shape_cast %10 : vector<1x1x1xi32> to vector<1x1x1xi32>
    %40 = vector.broadcast %39 : vector<1x1x1xi32> to vector<1x8x128xi32>
    %41 = arith.select %38, %40, %36 : vector<1x8x128xi1>, vector<1x8x128xi32>
    %c1_i32 = arith.constant 1 : i32
    %42 = vector.broadcast %c1_i32 : i32 to vector<1x8x128xi32>
    %43 = arith.cmpi eq, %35, %42 : vector<1x8x128xi32>
    %44 = vector.shape_cast %22 : vector<1x1x1xi32> to vector<1x1x1xi32>
    %45 = vector.broadcast %44 : vector<1x1x1xi32> to vector<1x8x128xi32>
    %46 = arith.select %43, %45, %41 : vector<1x8x128xi1>, vector<1x8x128xi32>
    %c2_i32 = arith.constant 2 : i32
    %47 = vector.broadcast %c2_i32 : i32 to vector<1x8x128xi32>
    %48 = arith.cmpi eq, %35, %47 : vector<1x8x128xi32>
    %49 = vector.shape_cast %34 : vector<1x1x1xi32> to vector<1x1x1xi32>
    %50 = vector.broadcast %49 : vector<1x1x1xi32> to vector<1x8x128xi32>
    %51 = arith.select %48, %50, %46 : vector<1x8x128xi1>, vector<1x8x128xi32>
    %c0_12 = arith.constant 0 : index
    %c0_13 = arith.constant 0 : index
    %c0_14 = arith.constant 0 : index
    %52 = vector.load %arg3[%c0_12, %c0_13, %c0_14] : memref<1x8x128xi32, #tpu.memory_space<vmem>>, vector<1x8x128xi32>
    tpu.vector_store %arg3[%c0_12, %c0_13, %c0_14], %51 {strides = array<i32>} : memref<1x8x128xi32, #tpu.memory_space<vmem>>, vector<1x8x128xi32>,
    return
  }
  func.func @transform_0(%arg0: i32, %arg1: i32) -> (i32, i32, i32) {
    %c0_i32 = arith.constant 0 : i32
    %c0_i32_0 = arith.constant 0 : i32
    return %arg0, %c0_i32, %arg1 : i32, i32, i32
  }
  func.func @transform_1(%arg0: i32, %arg1: i32) -> (i32, i32, i32) {
    %c0_i32 = arith.constant 0 : i32
    %c0_i32_0 = arith.constant 0 : i32
    %c0_i32_1 = arith.constant 0 : i32
    return %arg0, %c0_i32, %c0_i32_0 : i32, i32, i32
  }
}

</mosaic_0001>

<llo_original>
// kernel: tpu_custom_call.1
$region0: #{tpu_custom_call.1}
  #allocation0 [shape = 'u32[]', space=smem, size = 0x4, offset = 0x4, fixed_abs, tag = 'smem constant byte address 0x4 - core index']
  #allocation1 [shape = 'u32[144,128]{1,0:T(1,128)}', space=vmem, size = 0x12000, scoped, tag = 'internal scratch']
  #allocation2 [shape = 'f32[1,8,128]{2,1,0:T(8,128)}', space=vmem, size = 0x1000, scoped, tag = 'scratch operand']
  #allocation3 [shape = 's32[1,8,128]{2,1,0:T(8,128)}', space=vmem, size = 0x1000, scoped, tag = 'scratch operand']
  %s0 = inlined_call_operand.hbm [shape: f32[2,1,1024], index: 0, kind: input, shape index: {}]
  %s1 = inlined_call_operand.hbm [shape: s32[2,8,128], index: 1, kind: output, shape index: {}]
  %s2 = sld [smem:[#allocation0]]
  $region41: #{tpu_custom_call.1} parent=0
    _
  %s4 = ssub.s32 1, %s2
  %s5 = scalar_select 0, %s4, %s2
  $region1: #{tpu_custom_call.1} parent=0
    #allocation4 [shape = 'u8[8192]{0}', space=vmem, size = 0x2000, scoped, tag = 'input window, operand 0']
    #allocation5 [shape = 's32[2]{0}', space=sflag, size = 0x8, scoped, tag = 'scoped memory for tpu_custom_call.1']
    #allocation6 [shape = 's32[2]{0}', space=sflag, size = 0x8, scoped, tag = 'scoped memory for tpu_custom_call.1']
    #allocation7 [shape = 'u8[8192]{0}', space=vmem, size = 0x2000, scoped, tag = 'output window, operand 0']
    %6 = vsyncpa [#allocation5], 0
    %s7 = scalar_lea.sflag [#allocation5], 1
    %8 = vsyncpa %s7, 0
    %9 = vsyncpa [#allocation6], 0
    %s10 = scalar_lea.sflag [#allocation6], 1
    %11 = vsyncpa %s10, 0
    loop: start=0, step=1, limit=4
    $region2: #{tpu_custom_call.1} parent=1 // loop_pre_header
      _
    $region3: #{tpu_custom_call.1} parent=1 // loop_header
      %s13 = sphi 0, %s17
      %p14 = scmp.ge.s32.totalorder %s13, 4
      %s20 = sphi 0, %s32
      %s21 = sphi 0, %s28
      %s22 = sphi 0, %s20
      %s23 = sphi 0, %s21
      %s24 = sphi 0, %s22
      %s25 = sphi 0, %s23
      %s37 = sphi 0, %s39
      %s40 = sphi 0, %s37
      %s41 = sphi 0, %s40
      %s57 = sphi 0, %s41
      %s63 = sphi 0, %s65
      %s66 = sphi 0, %s63
      %s67 = sphi 0, %s66
      %s83 = sphi 0, %s67
    $region4: #{tpu_custom_call.1} parent=1 // loop_header_branch
      %16 = sbr.rel (%p14) target = $region8
    $region5: #{tpu_custom_call.1} parent=1 // loop_body
      %s18 = ssub.s32 %s13, 1
      %s19 = ssub.s32 %s13, 2
      %s26 = sadd.s32 1, %s21
      %p27 = scmp.ge.s32.totalorder %s26, 1
      %s28 = scalar_select %p27, 0, %s26
      %s29 = sadd.s32 1, %s20
      %s30 = scalar_select %p27, %s29, %s20
      %p31 = scmp.ge.s32.totalorder %s30, 2
      %s32 = scalar_select %p31, 0, %s30
      %s33 = ssub.s32 %s20, %s32
      %s34 = ssub.s32 %s21, %s28
      %s35 = sor.u32 %s33, %s34
      %p36 = scmp.eq.s32.totalorder %s35, 0
      %s38 = sadd.s32 %s37, 1
      %s39 = scalar_select %p36, %s37, %s38
      %p42 = pneg %p36
      %p43 = scmp.eq.s32.totalorder %s13, 1
      %p44 = por %p42, %p43
      %p45 = scmp.ne.s32.totalorder %s37, %s40
      %p46 = scmp.eq.s32.totalorder %s13, 0
      %p47 = por %p45, %p46
      %p48 = scmp.ne.s32.totalorder %s37, %s40
      %p49 = scmp.eq.s32.totalorder %s18, 1
      %p50 = por %p48, %p49
      %p51 = scmp.ne.s32.totalorder %s40, %s41
      %p52 = scmp.eq.s32.totalorder %s18, 0
      %p53 = por %p51, %p52
      %p54 = scmp.ne.s32.totalorder %s40, %s41
      %p55 = scmp.eq.s32.totalorder %s19, 1
      %p56 = por %p54, %p55
      %p58 = scmp.ne.s32.totalorder %s41, %s57
      %p59 = scmp.eq.s32.totalorder %s19, 0
      %p60 = por %p58, %p59
      %s61 = ssub.s32 %s20, %s32
      %p62 = scmp.eq.s32.totalorder %s61, 0
      %s64 = sadd.s32 %s63, 1
      %s65 = scalar_select %p62, %s63, %s64
      %p68 = pneg %p62
      %p69 = scmp.eq.s32.totalorder %s13, 1
      %p70 = por %p68, %p69
      %p71 = scmp.ne.s32.totalorder %s63, %s66
      %p72 = scmp.eq.s32.totalorder %s13, 0
      %p73 = por %p71, %p72
      %p74 = scmp.ne.s32.totalorder %s63, %s66
      %p75 = scmp.eq.s32.totalorder %s18, 1
      %p76 = por %p74, %p75
      %p77 = scmp.ne.s32.totalorder %s66, %s67
      %p78 = scmp.eq.s32.totalorder %s18, 0
      %p79 = por %p77, %p78
      %p80 = scmp.ne.s32.totalorder %s66, %s67
      %p81 = scmp.eq.s32.totalorder %s19, 1
      %p82 = por %p80, %p81
      %p84 = scmp.ne.s32.totalorder %s67, %s83
      %p85 = scmp.eq.s32.totalorder %s19, 0
      %p86 = por %p84, %p85
      %p87 = scmp.le.s32.totalorder 1, %s13
      %p88 = scmp.lt.s32.totalorder %s13, 3
      %p89 = pnand %p87, %p88
      %p90 = pneg %p89
      // Predicated region
      $region9: #{tpu_custom_call.1} parent=5 // pred_check
        _
      $region10: #{tpu_custom_call.1} parent=5 // pred_check_branch
        %92 = sbr.rel (%p89) target = $region12
      $region11: #{tpu_custom_call.1} parent=5 // pred_region
        %s93 = ssub.s32 %s13, 1
      $region12: #{tpu_custom_call.1} parent=5 // pred_fallthru
        _
      %p94 = scmp.lt.s32.totalorder %s13, 2
      // Predicated region
      $region13: #{tpu_custom_call.1} parent=5 // pred_check
        %p95 = pneg %p94
      $region14: #{tpu_custom_call.1} parent=5 // pred_check_branch
        %97 = sbr.rel (%p95) target = $region16
      $region15: #{tpu_custom_call.1} parent=5 // pred_region
        // Predicated region
        $region17: #{tpu_custom_call.1} parent=15 // pred_check
          %p98 = pneg %p47
        $region18: #{tpu_custom_call.1} parent=15 // pred_check_branch
          %100 = sbr.rel (%p98) target = $region20
        $region19: #{tpu_custom_call.1} parent=15 // pred_region
          %s101 = sand.u32 %s37, 1
          %s102 = scalar_lea.sflag [#allocation5], %s101
          %s103 = sand.u32 %s37, 1
          %s104 = smul.addr %s103, 8
          %s105 = scalar_lea.vmem [#allocation4], %s104
          %s106 = smul.u32 8, %s21
          %s108 = ssub.s32 128, 128
          %109 = vsyncadd %s102, %s108
          %s110 = smul.addr %s20, 8
          %s111 = sadd.s32 %s106, %s110
          %s112 = smul.addr %s111, 16
          %s113 = scalar_lea.hbm %s0, %s112
          %s115 = sshll.u32 %s105, 4
          %s116 = int_to_ptr.vmem [resolvable:$true] %s115
          %118 = dma.hbm_to_vmem [thread:$0]  %s113, 128, %s116, %s102
        $region20: #{tpu_custom_call.1} parent=15 // pred_fallthru
          _
      $region16: #{tpu_custom_call.1} parent=5 // pred_fallthru
        _
      %p119 = scmp.le.s32.totalorder 1, %s13
      %p120 = scmp.lt.s32.totalorder %s13, 3
      %p121 = pnand %p119, %p120
      %p122 = pneg %p121
      // Predicated region
      $region21: #{tpu_custom_call.1} parent=5 // pred_check
        _
      $region22: #{tpu_custom_call.1} parent=5 // pred_check_branch
        %124 = sbr.rel (%p121) target = $region24
      $region23: #{tpu_custom_call.1} parent=5 // pred_region
        %s125 = ssub.s32 %s13, 1
        %s126 = sand.u32 %s40, 1
        %s127 = scalar_lea.sflag [#allocation5], %s126
        %s128 = sand.u32 %s40, 1
        %s129 = smul.addr %s128, 8
        %s130 = scalar_lea.vmem [#allocation4], %s129
        // Predicated region
        $region25: #{tpu_custom_call.1} parent=23 // pred_check
          %p131 = pneg %p53
        $region26: #{tpu_custom_call.1} parent=23 // pred_check_branch
          %133 = sbr.rel (%p131) target = $region28
        $region27: #{tpu_custom_call.1} parent=23 // pred_region
          %134 = dma.done %s127, 128
        $region28: #{tpu_custom_call.1} parent=23 // pred_fallthru
          _
        %s135 = sand.u32 %s40, 1
        %s136 = scalar_lea.sflag [#allocation5], %s135
        %s137 = sand.u32 %s40, 1
        %s138 = smul.addr %s137, 8
        %s139 = scalar_lea.vmem [#allocation4], %s138
        %p140 = pneg %p53
        %p141 = pneg %p50
        %p142 = pneg %p79
        %p143 = pneg %p76
        %s144 = sand.u32 %s66, 1
        %s145 = scalar_lea.sflag [#allocation6], %s144
        %s146 = sand.u32 %s66, 1
        %s147 = smul.addr %s146, 8
        %s148 = scalar_lea.vmem [#allocation7], %s147
        %s149 = smul.u32 8, %s23
        %v150 = vld [vmem:[%s130] sm:$0xff]
        %v151 = vand.u32 2147483647, %v150
        %v152 = vlaneseq
        %v153 = vand.u32 %v152, 127
        %v154 = vadd.s32 %v153, 128
        %v155 = vadd.s32 %v153, 256
        %v156 = vadd.s32 %v153, 384
        %v157 = vadd.s32 %v153, 512
        %v158 = vadd.s32 %v153, 640
        %v159 = vadd.s32 %v153, 768
        %v160 = vadd.s32 %v153, 896
        %v162 = vlaneseq
        %v163 = vshrl.u32 %v162, 7
        %v164 = vsub.s32 0, %v163
        %v165 = vrot.slane %v151, %v164
        %v166 = vlaneseq
        %v167 = vshrl.u32 %v166, 7
        %v168 = vsub.s32 1, %v167
        %v169 = vrot.slane %v151, %v168
        %v170 = vlaneseq
        %v171 = vshrl.u32 %v170, 7
        %v172 = vsub.s32 2, %v171
        %v173 = vrot.slane %v151, %v172
        %v174 = vlaneseq
        %v175 = vshrl.u32 %v174, 7
        %v176 = vsub.s32 3, %v175
        %v177 = vrot.slane %v151, %v176
        %v178 = vlaneseq
        %v179 = vshrl.u32 %v178, 7
        %v180 = vsub.s32 4, %v179
        %v181 = vrot.slane %v151, %v180
        %v182 = vlaneseq
        %v183 = vshrl.u32 %v182, 7
        %v184 = vsub.s32 5, %v183
        %v185 = vrot.slane %v151, %v184
        %v186 = vlaneseq
        %v187 = vshrl.u32 %v186, 7
        %v188 = vsub.s32 6, %v187
        %v189 = vrot.slane %v151, %v188
        %v190 = vlaneseq
        %v191 = vshrl.u32 %v190, 7
        %v192 = vsub.s32 7, %v191
        %v193 = vrot.slane %v151, %v192
        %vm202 = vcmask 1040384
        %v203 = vsel %vm202, %v165, -inf
        %v204 = vsel %vm202, %v169, -inf
        %v205 = vsel %vm202, %v173, -inf
        %v206 = vsel %vm202, %v177, -inf
        %v207 = vsel %vm202, %v181, -inf
        %v208 = vmax.f32 %v203, %v207
        %v209 = vsel %vm202, %v185, -inf
        %v210 = vmax.f32 %v204, %v209
        %v211 = vsel %vm202, %v189, -inf
        %v212 = vmax.f32 %v205, %v211
        %v213 = vsel %vm202, %v193, -inf
        %v214 = vmax.f32 %v206, %v213
        %v215 = vmax.f32 %v208, %v210
        %v216 = vmax.f32 %v212, %v214
        %v217 = vmax.f32 %v215, %v216
        %218 = vmax.xlane.f32.xlu0 %v217
        %v219 = vpop.xlane.xlu0 %218
        %v220 = vrot.slane %v219, 4
        %v221 = vmax.f32 %v219, %v220
        %v222 = vrot.slane %v221, 2
        %v223 = vmax.f32 %v221, %v222
        %v224 = vrot.slane %v223, 1
        %v225 = vmax.f32 %v223, %v224
        %vm226 = vcmp.eq.f32.partialorder %v151, %v225
        %v227 = vcombine.low %v153, %v154
        %v228 = vcombine.low %v155, %v156
        %v229 = vcombine.low %v157, %v158
        %v230 = vcombine.low %v159, %v160
        %v232 = vunpack.c.l.s4 1966171168
        %v233 = vunpack.c.0.s8 %v232
        %v234 = vlaneseq
        %v235 = vshrl.u32 %v234, 7
        %v236 = vsub.s32 %v233, %v235
        %v237 = vrot.slane %v227, %v236
        %v239 = vunpack.c.l.s4 1966171168
        %v240 = vunpack.c.0.s8 %v239
        %v241 = vlaneseq
        %v242 = vshrl.u32 %v241, 7
        %v243 = vsub.s32 %v240, %v242
        %v244 = vrot.slane %v228, %v243
        %v246 = vunpack.c.l.s4 1966171168
        %v247 = vunpack.c.0.s8 %v246
        %v248 = vlaneseq
        %v249 = vshrl.u32 %v248, 7
        %v250 = vsub.s32 %v247, %v249
        %v251 = vrot.slane %v229, %v250
        %v253 = vunpack.c.l.s4 1966171168
        %v254 = vunpack.c.0.s8 %v253
        %v255 = vlaneseq
        %v256 = vshrl.u32 %v255, 7
        %v257 = vsub.s32 %v254, %v256
        %v258 = vrot.slane %v230, %v257
        %v259 = vcombine.low %v237, %v244
        %v260 = vcombine.low %v251, %v258
        %v262 = vunpack.c.l.s4 1966171168
        %v263 = vunpack.c.0.s8 %v262
        %v264 = vlaneseq
        %v265 = vshrl.u32 %v264, 7
        %v266 = vsub.s32 %v263, %v265
        %v267 = vrot.slane %v259, %v266
        %v269 = vunpack.c.l.s4 1966171168
        %v270 = vunpack.c.0.s8 %v269
        %v271 = vlaneseq
        %v272 = vshrl.u32 %v271, 7
        %v273 = vsub.s32 %v270, %v272
        %v274 = vrot.slane %v260, %v273
        %v275 = vcombine.low %v267, %v274
        %v276 = vsel %vm226, %v275, 1073741824
        %v277 = vlaneseq
        %v278 = vshrl.u32 %v277, 7
        %v279 = vsub.s32 0, %v278
        %v280 = vrot.slane %v276, %v279
        %v281 = vlaneseq
        %v282 = vshrl.u32 %v281, 7
        %v283 = vsub.s32 1, %v282
        %v284 = vrot.slane %v276, %v283
        %v285 = vlaneseq
        %v286 = vshrl.u32 %v285, 7
        %v287 = vsub.s32 2, %v286
        %v288 = vrot.slane %v276, %v287
        %v289 = vlaneseq
        %v290 = vshrl.u32 %v289, 7
        %v291 = vsub.s32 3, %v290
        %v292 = vrot.slane %v276, %v291
        %v293 = vlaneseq
        %v294 = vshrl.u32 %v293, 7
        %v295 = vsub.s32 4, %v294
        %v296 = vrot.slane %v276, %v295
        %v297 = vlaneseq
        %v298 = vshrl.u32 %v297, 7
        %v299 = vsub.s32 5, %v298
        %v300 = vrot.slane %v276, %v299
        %v301 = vlaneseq
        %v302 = vshrl.u32 %v301, 7
        %v303 = vsub.s32 6, %v302
        %v304 = vrot.slane %v276, %v303
        %v305 = vlaneseq
        %v306 = vshrl.u32 %v305, 7
        %v307 = vsub.s32 7, %v306
        %v308 = vrot.slane %v276, %v307
        %v309 = vsel %vm202, %v280, 2147483647
        %v310 = vsel %vm202, %v284, 2147483647
        %v311 = vsel %vm202, %v288, 2147483647
        %v312 = vsel %vm202, %v292, 2147483647
        %v313 = vsel %vm202, %v296, 2147483647
        %vm314 = vcmp.lt.s32.totalorder %v309, %v313
        %v315 = vsel %vm314, %v309, %v313
        %v316 = vsel %vm202, %v300, 2147483647
        %vm317 = vcmp.lt.s32.totalorder %v310, %v316
        %v318 = vsel %vm317, %v310, %v316
        %v319 = vsel %vm202, %v304, 2147483647
        %vm320 = vcmp.lt.s32.totalorder %v311, %v319
        %v321 = vsel %vm320, %v311, %v319
        %v322 = vsel %vm202, %v308, 2147483647
        %vm323 = vcmp.lt.s32.totalorder %v312, %v322
        %v324 = vsel %vm323, %v312, %v322
        %vm325 = vcmp.lt.s32.totalorder %v315, %v318
        %v326 = vsel %vm325, %v315, %v318
        %vm327 = vcmp.lt.s32.totalorder %v321, %v324
        %v328 = vsel %vm327, %v321, %v324
        %vm329 = vcmp.lt.s32.totalorder %v326, %v328
        %v330 = vsel %vm329, %v326, %v328
        %v331 = vand.u32 %v330, 65535
        %v332 = vshra.s32 %v330, 16
        %v333 = vcvt.s32.f32 %v331
        %v334 = vcvt.s32.f32 %v332
        %335 = vmin.xlane.f32.xlu0 %v334
        %v336 = vpop.xlane.xlu0 %335
        %vm337 = vcmp.eq.f32.partialorder %v334, %v336
        %v338 = vsel %vm337, %v333, inf
        %339 = vmin.xlane.f32.xlu0 %v338
        %v340 = vpop.xlane.xlu0 %339
        %v341 = vcvt.f32.s32 %v340
        %v342 = vcvt.f32.s32 %v336
        %v343 = vshll.u32 %v342, 16
        %v344 = vadd.s32 %v343, %v341
        %v345 = vrot.slane %v344, 4
        %vm346 = vcmp.lt.s32.totalorder %v344, %v345
        %v347 = vsel %vm346, %v344, %v345
        %v348 = vrot.slane %v347, 2
        %vm349 = vcmp.lt.s32.totalorder %v347, %v348
        %v350 = vsel %vm349, %v347, %v348
        %v351 = vrot.slane %v350, 1
        %vm352 = vcmp.lt.s32.totalorder %v350, %v351
        %v353 = vsel %vm352, %v350, %v351
        %vm354 = vcmp.eq.s32.totalorder %v153, %v353
        %vm355 = vcmp.eq.s32.totalorder %v154, %v353
        %vm356 = vcmp.eq.s32.totalorder %v155, %v353
        %vm357 = vcmp.eq.s32.totalorder %v156, %v353
        %vm358 = vcmp.eq.s32.totalorder %v157, %v353
        %vm359 = vcmp.eq.s32.totalorder %v158, %v353
        %vm360 = vcmp.eq.s32.totalorder %v159, %v353
        %vm361 = vcmp.eq.s32.totalorder %v160, %v353
        %v362 = vsel %vm354, -inf, %v165
        %v363 = vsel %vm355, -inf, %v169
        %v364 = vsel %vm356, -inf, %v173
        %v365 = vsel %vm357, -inf, %v177
        %v366 = vsel %vm358, -inf, %v181
        %v367 = vsel %vm359, -inf, %v185
        %v368 = vsel %vm360, -inf, %v189
        %v369 = vsel %vm361, -inf, %v193
        %v370 = vsel %vm202, %v362, -inf
        %v371 = vsel %vm202, %v363, -inf
        %v372 = vsel %vm202, %v364, -inf
        %v373 = vsel %vm202, %v365, -inf
        %v374 = vsel %vm202, %v366, -inf
        %v375 = vmax.f32 %v370, %v374
        %v376 = vsel %vm202, %v367, -inf
        %v377 = vmax.f32 %v371, %v376
        %v378 = vsel %vm202, %v368, -inf
        %v379 = vmax.f32 %v372, %v378
        %v380 = vsel %vm202, %v369, -inf
        %v381 = vmax.f32 %v373, %v380
        %v382 = vmax.f32 %v375, %v377
        %v383 = vmax.f32 %v379, %v381
        %v384 = vmax.f32 %v382, %v383
        %385 = vmax.xlane.f32.xlu0 %v384
        %v386 = vpop.xlane.xlu0 %385
        %v387 = vrot.slane %v386, 4
        %v388 = vmax.f32 %v386, %v387
        %v389 = vrot.slane %v388, 2
        %v390 = vmax.f32 %v388, %v389
        %v391 = vrot.slane %v390, 1
        %v392 = vmax.f32 %v390, %v391
        %vm393 = vcmp.eq.f32.partialorder %v362, %v392
        %vm394 = vcmp.eq.f32.partialorder %v363, %v392
        %vm395 = vcmp.eq.f32.partialorder %v364, %v392
        %vm396 = vcmp.eq.f32.partialorder %v365, %v392
        %vm397 = vcmp.eq.f32.partialorder %v366, %v392
        %vm398 = vcmp.eq.f32.partialorder %v367, %v392
        %vm399 = vcmp.eq.f32.partialorder %v368, %v392
        %vm400 = vcmp.eq.f32.partialorder %v369, %v392
        %v401 = vsel %vm393, %v153, 1073741824
        %v402 = vsel %vm394, %v154, 1073741824
        %v403 = vsel %vm395, %v155, 1073741824
        %v404 = vsel %vm396, %v156, 1073741824
        %v405 = vsel %vm397, %v157, 1073741824
        %v406 = vsel %vm398, %v158, 1073741824
        %v407 = vsel %vm399, %v159, 1073741824
        %v408 = vsel %vm400, %v160, 1073741824
        %v409 = vsel %vm202, %v401, 2147483647
        %v410 = vsel %vm202, %v402, 2147483647
        %v411 = vsel %vm202, %v403, 2147483647
        %v412 = vsel %vm202, %v404, 2147483647
        %v413 = vsel %vm202, %v405, 2147483647
        %vm414 = vcmp.lt.s32.totalorder %v409, %v413
        %v415 = vsel %vm414, %v409, %v413
        %v416 = vsel %vm202, %v406, 2147483647
        %vm417 = vcmp.lt.s32.totalorder %v410, %v416
        %v418 = vsel %vm417, %v410, %v416
        %v419 = vsel %vm202, %v407, 2147483647
        %vm420 = vcmp.lt.s32.totalorder %v411, %v419
        %v421 = vsel %vm420, %v411, %v419
        %v422 = vsel %vm202, %v408, 2147483647
        %vm423 = vcmp.lt.s32.totalorder %v412, %v422
        %v424 = vsel %vm423, %v412, %v422
        %vm425 = vcmp.lt.s32.totalorder %v415, %v418
        %v426 = vsel %vm425, %v415, %v418
        %vm427 = vcmp.lt.s32.totalorder %v421, %v424
        %v428 = vsel %vm427, %v421, %v424
        %vm429 = vcmp.lt.s32.totalorder %v426, %v428
        %v430 = vsel %vm429, %v426, %v428
        %v431 = vand.u32 %v430, 65535
        %v432 = vshra.s32 %v430, 16
        %v433 = vcvt.s32.f32 %v431
        %v434 = vcvt.s32.f32 %v432
        %435 = vmin.xlane.f32.xlu0 %v434
        %v436 = vpop.xlane.xlu0 %435
        %vm437 = vcmp.eq.f32.partialorder %v434, %v436
        %v438 = vsel %vm437, %v433, inf
        %439 = vmin.xlane.f32.xlu0 %v438
        %v440 = vpop.xlane.xlu0 %439
        %v441 = vcvt.f32.s32 %v440
        %v442 = vcvt.f32.s32 %v436
        %v443 = vshll.u32 %v442, 16
        %v444 = vadd.s32 %v443, %v441
        %v445 = vrot.slane %v444, 4
        %vm446 = vcmp.lt.s32.totalorder %v444, %v445
        %v447 = vsel %vm446, %v444, %v445
        %v448 = vrot.slane %v447, 2
        %vm449 = vcmp.lt.s32.totalorder %v447, %v448
        %v450 = vsel %vm449, %v447, %v448
        %v451 = vrot.slane %v450, 1
        %vm452 = vcmp.lt.s32.totalorder %v450, %v451
        %v453 = vsel %vm452, %v450, %v451
        %vm454 = vcmp.eq.s32.totalorder %v153, %v453
        %vm455 = vcmp.eq.s32.totalorder %v154, %v453
        %vm456 = vcmp.eq.s32.totalorder %v155, %v453
        %vm457 = vcmp.eq.s32.totalorder %v156, %v453
        %vm458 = vcmp.eq.s32.totalorder %v157, %v453
        %vm459 = vcmp.eq.s32.totalorder %v158, %v453
        %vm460 = vcmp.eq.s32.totalorder %v159, %v453
        %vm461 = vcmp.eq.s32.totalorder %v160, %v453
        %v462 = vsel %vm454, -inf, %v362
        %v463 = vsel %vm455, -inf, %v363
        %v464 = vsel %vm456, -inf, %v364
        %v465 = vsel %vm457, -inf, %v365
        %v466 = vsel %vm458, -inf, %v366
        %v467 = vsel %vm459, -inf, %v367
        %v468 = vsel %vm460, -inf, %v368
        %v469 = vsel %vm461, -inf, %v369
        %v470 = vsel %vm202, %v462, -inf
        %v471 = vsel %vm202, %v463, -inf
        %v472 = vsel %vm202, %v464, -inf
        %v473 = vsel %vm202, %v465, -inf
        %v474 = vsel %vm202, %v466, -inf
        %v475 = vmax.f32 %v470, %v474
        %v476 = vsel %vm202, %v467, -inf
        %v477 = vmax.f32 %v471, %v476
        %v478 = vsel %vm202, %v468, -inf
        %v479 = vmax.f32 %v472, %v478
        %v480 = vsel %vm202, %v469, -inf
        %v481 = vmax.f32 %v473, %v480
        %v482 = vmax.f32 %v475, %v477
        %v483 = vmax.f32 %v479, %v481
        %v484 = vmax.f32 %v482, %v483
        %485 = vmax.xlane.f32.xlu0 %v484
        %v486 = vpop.xlane.xlu0 %485
        %v487 = vrot.slane %v486, 4
        %v488 = vmax.f32 %v486, %v487
        %v489 = vrot.slane %v488, 2
        %v490 = vmax.f32 %v488, %v489
        %v491 = vrot.slane %v490, 1
        %v492 = vmax.f32 %v490, %v491
        %vm493 = vcmp.eq.f32.partialorder %v462, %v492
        %vm494 = vcmp.eq.f32.partialorder %v463, %v492
        %vm495 = vcmp.eq.f32.partialorder %v464, %v492
        %vm496 = vcmp.eq.f32.partialorder %v465, %v492
        %vm497 = vcmp.eq.f32.partialorder %v466, %v492
        %vm498 = vcmp.eq.f32.partialorder %v467, %v492
        %vm499 = vcmp.eq.f32.partialorder %v468, %v492
        %vm500 = vcmp.eq.f32.partialorder %v469, %v492
        %v501 = vsel %vm493, %v153, 1073741824
        %v502 = vsel %vm494, %v154, 1073741824
        %v503 = vsel %vm495, %v155, 1073741824
        %v504 = vsel %vm496, %v156, 1073741824
        %v505 = vsel %vm497, %v157, 1073741824
        %v506 = vsel %vm498, %v158, 1073741824
        %v507 = vsel %vm499, %v159, 1073741824
        %v508 = vsel %vm500, %v160, 1073741824
        %v509 = vsel %vm202, %v501, 2147483647
        %v510 = vsel %vm202, %v502, 2147483647
        %v511 = vsel %vm202, %v503, 2147483647
        %v512 = vsel %vm202, %v504, 2147483647
        %v513 = vsel %vm202, %v505, 2147483647
        %vm514 = vcmp.lt.s32.totalorder %v509, %v513
        %v515 = vsel %vm514, %v509, %v513
        %v516 = vsel %vm202, %v506, 2147483647
        %vm517 = vcmp.lt.s32.totalorder %v510, %v516
        %v518 = vsel %vm517, %v510, %v516
        %v519 = vsel %vm202, %v507, 2147483647
        %vm520 = vcmp.lt.s32.totalorder %v511, %v519
        %v521 = vsel %vm520, %v511, %v519
        %v522 = vsel %vm202, %v508, 2147483647
        %vm523 = vcmp.lt.s32.totalorder %v512, %v522
        %v524 = vsel %vm523, %v512, %v522
        %vm525 = vcmp.lt.s32.totalorder %v515, %v518
        %v526 = vsel %vm525, %v515, %v518
        %vm527 = vcmp.lt.s32.totalorder %v521, %v524
        %v528 = vsel %vm527, %v521, %v524
        %vm529 = vcmp.lt.s32.totalorder %v526, %v528
        %v530 = vsel %vm529, %v526, %v528
        %v531 = vand.u32 %v530, 65535
        %v532 = vshra.s32 %v530, 16
        %v533 = vcvt.s32.f32 %v531
        %v534 = vcvt.s32.f32 %v532
        %535 = vmin.xlane.f32.xlu0 %v534
        %v536 = vpop.xlane.xlu0 %535
        %vm537 = vcmp.eq.f32.partialorder %v534, %v536
        %v538 = vsel %vm537, %v533, inf
        %539 = vmin.xlane.f32.xlu0 %v538
        %v540 = vpop.xlane.xlu0 %539
        %v541 = vcvt.f32.s32 %v540
        %v542 = vcvt.f32.s32 %v536
        %v543 = vshll.u32 %v542, 16
        %v544 = vadd.s32 %v543, %v541
        %v545 = vrot.slane %v544, 4
        %vm546 = vcmp.lt.s32.totalorder %v544, %v545
        %v547 = vsel %vm546, %v544, %v545
        %v548 = vrot.slane %v547, 2
        %vm549 = vcmp.lt.s32.totalorder %v547, %v548
        %v550 = vsel %vm549, %v547, %v548
        %v551 = vrot.slane %v550, 1
        %vm552 = vcmp.lt.s32.totalorder %v550, %v551
        %v553 = vsel %vm552, %v550, %v551
        %v554 = vlaneseq
        %v555 = vshrl.u32 %v554, 7
        %vm556 = vcmp.eq.s32.totalorder %v555, 0
        %v557 = vsel %vm556, %v353, 1073741824
        %vm558 = vcmp.eq.s32.totalorder %v555, 1
        %v559 = vsel %vm558, %v453, %v557
        %vm560 = vcmp.eq.s32.totalorder %v555, 2
        %v561 = vsel %vm560, %v553, %v559
        %562 = vst [vmem:[%s148] sm:$0xff] %v561
        %s563 = sand.u32 %s66, 1
        %s564 = scalar_lea.sflag [#allocation6], %s563
        %s565 = sand.u32 %s66, 1
        %s566 = smul.addr %s565, 8
        %s567 = scalar_lea.vmem [#allocation7], %s566
        // Predicated region
        $region29: #{tpu_custom_call.1} parent=23 // pred_check
          %p568 = pneg %p76
        $region30: #{tpu_custom_call.1} parent=23 // pred_check_branch
          %570 = sbr.rel (%p568) target = $region32
        $region31: #{tpu_custom_call.1} parent=23 // pred_region
          %s572 = ssub.s32 128, 128
          %573 = vsyncadd %s564, %s572
          %s574 = smul.addr %s22, 128
          %s575 = scalar_lea.hbm %s1, %s574
          %s577 = sshll.u32 %s567, 4
          %s578 = int_to_ptr.vmem [resolvable:$true] %s577
          %580 = dma.vmem_to_hbm [thread:$0]  %s578, 128, %s575, %s564
        $region32: #{tpu_custom_call.1} parent=23 // pred_fallthru
          _
      $region24: #{tpu_custom_call.1} parent=5 // pred_fallthru
        _
      %p581 = scmp.le.s32.totalorder 2, %s13
      // Predicated region
      $region33: #{tpu_custom_call.1} parent=5 // pred_check
        %p582 = pneg %p581
      $region34: #{tpu_custom_call.1} parent=5 // pred_check_branch
        %584 = sbr.rel (%p582) target = $region36
      $region35: #{tpu_custom_call.1} parent=5 // pred_region
        %s585 = ssub.s32 %s13, 2
        // Predicated region
        $region37: #{tpu_custom_call.1} parent=35 // pred_check
          %p586 = pneg %p82
        $region38: #{tpu_custom_call.1} parent=35 // pred_check_branch
          %588 = sbr.rel (%p586) target = $region40
        $region39: #{tpu_custom_call.1} parent=35 // pred_region
          %s589 = sand.u32 %s67, 1
          %s590 = scalar_lea.sflag [#allocation6], %s589
          %s591 = sand.u32 %s67, 1
          %s592 = smul.addr %s591, 8
          %s593 = scalar_lea.vmem [#allocation7], %s592
          %594 = dma.done %s590, 128
        $region40: #{tpu_custom_call.1} parent=35 // pred_fallthru
          _
      $region36: #{tpu_custom_call.1} parent=5 // pred_fallthru
        _
    $region6: #{tpu_custom_call.1} parent=1 // loop_footer
      %s17 = sadd.s32 1, %s13
    $region7: #{tpu_custom_call.1} parent=1 // loop_footer_branch
      %12 = sbr.rel target = $region3
    $region8: #{tpu_custom_call.1} parent=1 // loop_exit
      _
    %595 = vsyncpa [#allocation5], 1
    %s596 = scalar_lea.sflag [#allocation5], 1
    %597 = vsyncpa %s596, 1
    %598 = vsyncpa [#allocation6], 1
    %s599 = scalar_lea.sflag [#allocation6], 1
    %600 = vsyncpa %s599, 1

</llo_original>
